<compile_context>
chip_gen: v7x
topology: tpu7x:2x2x1
jax: 0.10.0
libtpu: 0.0.40
codegen_flags: <defaults>
</compile_context>

<pallas_src>
import functools

import jax
import jax.numpy as jnp
from jax import lax
from jax.experimental import pallas as pl
from jax.experimental.pallas import tpu as pltpu


def _round_up(x, m):
    return (x + m - 1) // m * m


def _supcon_kernel(*refs, temperature, base_temperature, n_contrast,
                   block_m, block_n, use_labels):
    if use_labels:
        (lab_r_ref, lab_c_ref, fr_ref, fc_ref, o_ref,
         m_sc, l_sc, s_sc, c_sc) = refs
    else:
        (pos_ref, fr_ref, fc_ref, o_ref,
         m_sc, l_sc, s_sc, c_sc) = refs

    i = pl.program_id(0)          # anchor-row tile
    j = pl.program_id(1)          # contrast-column tile (reduction axis)

    @pl.when(j == 0)
    def _init():
        m_sc[...] = jnp.full((block_m, 1), -jnp.inf, dtype=jnp.float32)
        l_sc[...] = jnp.zeros((block_m, 1), dtype=jnp.float32)
        s_sc[...] = jnp.zeros((block_m, 1), dtype=jnp.float32)
        c_sc[...] = jnp.zeros((block_m, 1), dtype=jnp.float32)

    # Similarity tile on the MXU: contract last dims of both operands (no transpose).
    sim = lax.dot_general(
        fr_ref[...], fc_ref[...],
        dimension_numbers=(((1,), (1,)), ((), ())),
        preferred_element_type=jnp.float32) * (1.0 / temperature)    # [bm, bn] f32

    # Masks built in-kernel (cheap VPU work hidden under the MXU).
    row_ids = i * block_m + lax.broadcasted_iota(jnp.int32, (block_m, block_n), 0)
    col_ids = j * block_n + lax.broadcasted_iota(jnp.int32, (block_m, block_n), 1)
    not_self = row_ids != col_ids
    col_valid = col_ids < n_contrast          # drop padding columns

    if use_labels:
        pos = lab_r_ref[...] == lab_c_ref[...]        # [bm,1] == [1,bn] -> [bm,bn]
    else:
        pos = pos_ref[...] > 0.5

    denom_mask = jnp.where(not_self & col_valid, 1.0, 0.0).astype(jnp.float32)
    pos_mask = jnp.where(pos & not_self & col_valid, 1.0, 0.0).astype(jnp.float32)

    # Online log-sum-exp over the contrast axis (denominator excludes self).
    m_prev = m_sc[...]
    m_tile = jnp.max(jnp.where(col_valid, sim, -jnp.inf), axis=1, keepdims=True)
    m_new = jnp.maximum(m_prev, m_tile)
    e = jnp.exp(sim - m_new) * denom_mask
    l_sc[...] = l_sc[...] * jnp.exp(m_prev - m_new) + jnp.sum(e, axis=1, keepdims=True)
    m_sc[...] = m_new

    # Fused numerator: sum(mask*log_prob) = sum(mask*sim) - mask_sum * lse.
    s_sc[...] = s_sc[...] + jnp.sum(pos_mask * sim, axis=1, keepdims=True)
    c_sc[...] = c_sc[...] + jnp.sum(pos_mask, axis=1, keepdims=True)

    @pl.when(j == pl.num_programs(1) - 1)
    def _finalize():
        lse = m_sc[...] + jnp.log(l_sc[...])
        # 0/0 -> NaN for anchors with no positives, same as the PyTorch reference.
        mean_log_prob_pos = s_sc[...] / c_sc[...] - lse
        o_ref[...] = (-(temperature / base_temperature) * mean_log_prob_pos
                      ).astype(o_ref.dtype)


def supcon_loss(features, labels=None, mask=None, temperature=0.07,
                contrast_mode='all', base_temperature=None,
                block_size=256, matmul_dtype=None):
    """Pallas implementation of SupConLoss.forward.

    features: [bsz, n_views, ...]   labels: [bsz] (optional)   mask: [bsz, bsz] (optional)
    """
    if base_temperature is None:
        # The reference module sets self.base_temperature = temperature.
        base_temperature = temperature
    if features.ndim < 3:
        raise ValueError('`features` needs to be [bsz, n_views, ...]')
    if features.ndim > 3:
        features = features.reshape(features.shape[0], features.shape[1], -1)
    if contrast_mode not in ('all', 'one'):
        raise ValueError('Unknown mode: {}'.format(contrast_mode))
    if labels is not None and mask is not None:
        raise ValueError('Cannot define both `labels` and `mask`')
    assert block_size % 128 == 0, 'block_size must be a multiple of 128'

    bsz, n_views, dim = features.shape
    n_contrast = bsz * n_views
    n_anchor = n_contrast if contrast_mode == 'all' else bsz

    if matmul_dtype is None:
        matmul_dtype = features.dtype

    # view-major stacking == torch.cat(torch.unbind(features, dim=1), dim=0)
    contrast_feature = jnp.swapaxes(features, 0, 1).reshape(n_contrast, dim)
    contrast_feature = contrast_feature.astype(matmul_dtype)

    use_labels = mask is None
    if use_labels:
        if labels is None:
            lab = jnp.arange(bsz, dtype=jnp.int32)       # eye(bsz) positives (SimCLR)
        else:
            lab = jnp.asarray(labels).reshape(-1).astype(jnp.int32)
            if lab.shape[0] != bsz:
                raise ValueError('Num of labels does not match num of features')
        col_labels = jnp.tile(lab, n_views)              # [N], view-major order
        row_labels = col_labels[:n_anchor]
    else:
        small = jnp.asarray(mask, dtype=jnp.float32)
        anchor_count = n_views if contrast_mode == 'all' else 1
        big_mask = jnp.tile(small, (anchor_count, n_views))     # [n_anchor, N]
        # TODO(synk): the explicit-mask path still ships an O(M*N) mask; the label
        # path builds it in-kernel and is the optimized path.

    # ---- tiling (256-aligned for v6e/v7x MXU; full-size single tile when small) ----
    block_n = block_size if n_contrast > block_size else _round_up(n_contrast, 8)
    block_m = block_size if n_anchor > block_size else _round_up(n_anchor, 8)
    n_pad = _round_up(n_contrast, block_n)
    m_pad = _round_up(n_anchor, block_m)
    grid = (m_pad // block_m, n_pad // block_n)

    fcol = jnp.zeros((n_pad, dim), matmul_dtype).at[:n_contrast].set(contrast_feature)
    if contrast_mode == 'all':
        frow = fcol[:m_pad]
    else:
        frow = jnp.zeros((m_pad, dim), matmul_dtype).at[:n_anchor].set(
            contrast_feature[:n_anchor])
    # TODO(synk): chunk the feature dim D (third grid axis) for very large D.

    kernel = functools.partial(
        _supcon_kernel,
        temperature=float(temperature),
        base_temperature=float(base_temperature),
        n_contrast=n_contrast,
        block_m=block_m, block_n=block_n,
        use_labels=use_labels)

    feat_row_spec = pl.BlockSpec((block_m, dim), lambda i, j: (i, 0))
    feat_col_spec = pl.BlockSpec((block_n, dim), lambda i, j: (j, 0))
    out_spec = pl.BlockSpec((block_m, 1), lambda i, j: (i, 0))

    if use_labels:
        lab_row = jnp.full((m_pad, 1), -1, jnp.int32).at[:n_anchor, 0].set(row_labels)
        lab_col = jnp.full((1, n_pad), -2, jnp.int32).at[0, :n_contrast].set(col_labels)
        inputs = (lab_row, lab_col, frow, fcol)
        in_specs = [pl.BlockSpec((block_m, 1), lambda i, j: (i, 0)),
                    pl.BlockSpec((1, block_n), lambda i, j: (0, j)),
                    feat_row_spec, feat_col_spec]
    else:
        pos = jnp.zeros((m_pad, n_pad), jnp.float32).at[:n_anchor, :n_contrast].set(big_mask)
        inputs = (pos, frow, fcol)
        in_specs = [pl.BlockSpec((block_m, block_n), lambda i, j: (i, j)),
                    feat_row_spec, feat_col_spec]

    fbytes = jnp.dtype(matmul_dtype).itemsize
    cost = pl.CostEstimate(
        flops=2 * m_pad * n_pad * dim,
        transcendentals=m_pad * n_pad,
        bytes_accessed=int(grid[0] * block_m * dim * fbytes
                           + grid[0] * grid[1] * block_n * dim * fbytes
                           + (m_pad + n_pad) * 4 + m_pad * 4))

    per_row = pl.pallas_call(
        kernel,
        out_shape=jax.ShapeDtypeStruct((m_pad, 1), jnp.float32),
        grid_spec=pltpu.PrefetchScalarGridSpec(
            num_scalar_prefetch=0,
            grid=grid,
            in_specs=in_specs,
            out_specs=out_spec,
            scratch_shapes=[pltpu.VMEM((block_m, 1), jnp.float32)] * 4),
        compiler_params=pltpu.CompilerParams(
            dimension_semantics=("parallel", "arbitrary")),
        cost_estimate=cost,
    )(*inputs)

    # Final scalar mean over the (anchor_count * bsz) real anchors, in plain JAX.
    return jnp.mean(per_row[:n_anchor, 0])


def _supcon_loss_ref(features, labels=None, mask=None, temperature=0.07,
                     base_temperature=None, contrast_mode='all'):
    """Plain-JAX mirror of the PyTorch reference, for validation."""
    if base_temperature is None:
        base_temperature = temperature
    bsz, n_views, dim = features.shape
    if labels is None and mask is None:
        mask = jnp.eye(bsz, dtype=jnp.float32)
    elif labels is not None:
        labels = jnp.asarray(labels).reshape(-1, 1)
        mask = (labels == labels.T).astype(jnp.float32)
    else:
        mask = jnp.asarray(mask, dtype=jnp.float32)
    contrast_feature = jnp.swapaxes(features, 0, 1).reshape(bsz * n_views, dim).astype(jnp.float32)
    if contrast_mode == 'one':
        anchor_feature, anchor_count = features[:, 0].astype(jnp.float32), 1
    else:
        anchor_feature, anchor_count = contrast_feature, n_views
    sim = (anchor_feature @ contrast_feature.T) / temperature
    logits = sim - jnp.max(sim, axis=1, keepdims=True)
    n_anchor = anchor_count * bsz
    n_contrast = n_views * bsz
    logits_mask = jnp.ones((n_anchor, n_contrast), jnp.float32).at[
        jnp.arange(n_anchor), jnp.arange(n_anchor)].set(0.0)
    mask = jnp.tile(mask, (anchor_count, n_views)) * logits_mask
    exp_logits = jnp.exp(logits) * logits_mask
    log_prob = logits - jnp.log(jnp.sum(exp_logits, axis=1, keepdims=True))
    mlpp = jnp.sum(mask * log_prob, axis=1) / jnp.sum(mask, axis=1)
    return jnp.mean(-(temperature / base_temperature) * mlpp)


if __name__ == "__main__":
    key = jax.random.PRNGKey(0)
    k1, k2, k3, k4 = jax.random.split(key, 4)

    # Small shapes consistent with the module: features [bsz, n_views, dim].
    bsz, n_views, dim = 8, 2, 32
    features = jax.random.normal(k1, (bsz, n_views, dim), dtype=jnp.float32)
    features = features / jnp.linalg.norm(features, axis=-1, keepdims=True)
    labels = jax.random.randint(k2, (bsz,), 0, 3)

    # 1) supervised, contrast_mode='all' (single tile)
    loss = jax.block_until_ready(supcon_loss(features, labels=labels))
    ref = _supcon_loss_ref(features, labels=labels)
    assert jnp.allclose(loss, ref, rtol=1e-5, atol=1e-5), (loss, ref)

    # 2) SimCLR path (labels=None, mask=None)
    loss_u = jax.block_until_ready(supcon_loss(features))
    ref_u = _supcon_loss_ref(features)
    assert jnp.allclose(loss_u, ref_u, rtol=1e-5, atol=1e-5), (loss_u, ref_u)

    # 3) explicit mask path
    m = (labels.reshape(-1, 1) == labels.reshape(1, -1)).astype(jnp.float32)
    loss_m = jax.block_until_ready(supcon_loss(features, mask=m))
    assert jnp.allclose(loss_m, ref, rtol=1e-5, atol=1e-5), (loss_m, ref)

    # 4) contrast_mode='one'
    loss_o = jax.block_until_ready(
        supcon_loss(features, labels=labels, contrast_mode='one'))
    ref_o = _supcon_loss_ref(features, labels=labels, contrast_mode='one')
    assert jnp.allclose(loss_o, ref_o, rtol=1e-5, atol=1e-5), (loss_o, ref_o)

    # 5) multi-tile + padding path (exercises the online LSE across column tiles)
    bsz2 = 160
    f2 = jax.random.normal(k3, (bsz2, 2, dim), dtype=jnp.float32)
    f2 = f2 / jnp.linalg.norm(f2, axis=-1, keepdims=True)
    lab2 = jax.random.randint(k4, (bsz2,), 0, 10)
    loss2 = jax.block_until_ready(supcon_loss(f2, labels=lab2))
    ref2 = _supcon_loss_ref(f2, labels=lab2)
    assert jnp.allclose(loss2, ref2, rtol=1e-4, atol=1e-4), (loss2, ref2)

    # 6) bf16 MXU operands (f32 accumulation) — looser tolerance
    loss_bf16 = jax.block_until_ready(
        supcon_loss(features, labels=labels, matmul_dtype=jnp.bfloat16))
    assert jnp.allclose(loss_bf16, ref, rtol=5e-2, atol=1e-1), (loss_bf16, ref)

    print("KERNEL_OK")
</pallas_src>

<mosaic_0001>
module attributes {stable_mosaic.version = 11 : i64} {
  func.func @_supcon_kernel(%arg0: i32, %arg1: i32, %arg2: memref<16x1xi32, #tpu.memory_space<vmem>>, %arg3: memref<1x16xi32, #tpu.memory_space<vmem>>, %arg4: memref<16x32xf32, #tpu.memory_space<vmem>>, %arg5: memref<16x32xf32, #tpu.memory_space<vmem>>, %arg6: memref<16x1xf32, #tpu.memory_space<vmem>>, %arg7: memref<16x1xf32, #tpu.memory_space<vmem>>, %arg8: memref<16x1xf32, #tpu.memory_space<vmem>>, %arg9: memref<16x1xf32, #tpu.memory_space<vmem>>, %arg10: memref<16x1xf32, #tpu.memory_space<vmem>>) attributes {dimension_semantics = [#tpu.dimension_semantics<parallel>, #tpu.dimension_semantics<arbitrary>], iteration_bounds = array<i64: 1, 1>, scalar_prefetch = 0 : i64, scratch_operands = 4 : i64, tpu.core_type = #tpu.core_type<tc>, window_params = [{transform_indices = @transform_0, window_bounds = array<i64: 16, 1>}, {transform_indices = @transform_1, window_bounds = array<i64: 1, 16>}, {transform_indices = @transform_2, window_bounds = array<i64: 16, 32>}, {transform_indices = @transform_3, window_bounds = array<i64: 16, 32>}, {transform_indices = @transform_4, window_bounds = array<i64: 16, 1>}]} {
    %c0_i32 = arith.constant 0 : i32
    %0 = arith.cmpi eq, %arg1, %c0_i32 : i32
    %1 = arith.extui %0 : i1 to i32
    %c0_i32_0 = arith.constant 0 : i32
    %2 = arith.cmpi ne, %1, %c0_i32_0 : i32
    scf.if %2 {
      %cst_38 = arith.constant 0xFF800000 : f32
      %66 = vector.broadcast %cst_38 : f32 to vector<16x1xf32>
      %c0_39 = arith.constant 0 : index
      %c0_40 = arith.constant 0 : index
      %67 = vector.load %arg7[%c0_39, %c0_40] : memref<16x1xf32, #tpu.memory_space<vmem>>, vector<16x1xf32>
      tpu.vector_store %arg7[%c0_39, %c0_40], %66 {strides = array<i32>} : memref<16x1xf32, #tpu.memory_space<vmem>>, vector<16x1xf32>,
      %cst_41 = arith.constant 0.000000e+00 : f32
      %68 = vector.broadcast %cst_41 : f32 to vector<16x1xf32>
      %c0_42 = arith.constant 0 : index
      %c0_43 = arith.constant 0 : index
      %69 = vector.load %arg8[%c0_42, %c0_43] : memref<16x1xf32, #tpu.memory_space<vmem>>, vector<16x1xf32>
      tpu.vector_store %arg8[%c0_42, %c0_43], %68 {strides = array<i32>} : memref<16x1xf32, #tpu.memory_space<vmem>>, vector<16x1xf32>,
      %cst_44 = arith.constant 0.000000e+00 : f32
      %70 = vector.broadcast %cst_44 : f32 to vector<16x1xf32>
      %c0_45 = arith.constant 0 : index
      %c0_46 = arith.constant 0 : index
      %71 = vector.load %arg9[%c0_45, %c0_46] : memref<16x1xf32, #tpu.memory_space<vmem>>, vector<16x1xf32>
      tpu.vector_store %arg9[%c0_45, %c0_46], %70 {strides = array<i32>} : memref<16x1xf32, #tpu.memory_space<vmem>>, vector<16x1xf32>,
      %cst_47 = arith.constant 0.000000e+00 : f32
      %72 = vector.broadcast %cst_47 : f32 to vector<16x1xf32>
      %c0_48 = arith.constant 0 : index
      %c0_49 = arith.constant 0 : index
      %73 = vector.load %arg10[%c0_48, %c0_49] : memref<16x1xf32, #tpu.memory_space<vmem>>, vector<16x1xf32>
      tpu.vector_store %arg10[%c0_48, %c0_49], %72 {strides = array<i32>} : memref<16x1xf32, #tpu.memory_space<vmem>>, vector<16x1xf32>,
    } else {
    }
    %c0 = arith.constant 0 : index
    %c0_1 = arith.constant 0 : index
    %3 = vector.load %arg4[%c0, %c0_1] : memref<16x32xf32, #tpu.memory_space<vmem>>, vector<16x32xf32>
    %c0_2 = arith.constant 0 : index
    %c0_3 = arith.constant 0 : index
    %4 = vector.load %arg5[%c0_2, %c0_3] : memref<16x32xf32, #tpu.memory_space<vmem>>, vector<16x32xf32>
    %cst = arith.constant dense<0.000000e+00> : vector<16x16xf32>
    %5 = tpu.matmul %3, %4, %cst {dimension_numbers = #tpu.dot_dimension_numbers<[1], [1], [0], [0], [0, 0, 1, 0], [], []>} : vector<16x32xf32>, vector<16x32xf32>, vector<16x16xf32> -> vector<16x16xf32>
    %cst_4 = arith.constant 14.2857141 : f32
    %6 = vector.broadcast %cst_4 : f32 to vector<16x16xf32>
    %7 = arith.mulf %5, %6 : vector<16x16xf32>
    %c16_i32 = arith.constant 16 : i32
    %8 = arith.muli %arg0, %c16_i32 : i32
    %9 = tpu.iota {dimensions = array<i32: 0>} : vector<16x16xi32>
    %10 = vector.broadcast %8 : i32 to vector<16x16xi32>
    %11 = arith.addi %10, %9 : vector<16x16xi32>
    %c16_i32_5 = arith.constant 16 : i32
    %12 = arith.muli %arg1, %c16_i32_5 : i32
    %13 = tpu.iota {dimensions = array<i32: 1>} : vector<16x16xi32>
    %14 = vector.broadcast %12 : i32 to vector<16x16xi32>
    %15 = arith.addi %14, %13 : vector<16x16xi32>
    %16 = arith.cmpi ne, %11, %15 : vector<16x16xi32>
    %c16_i32_6 = arith.constant 16 : i32
    %17 = vector.broadcast %c16_i32_6 : i32 to vector<16x16xi32>
    %18 = arith.cmpi slt, %15, %17 : vector<16x16xi32>
    %c0_7 = arith.constant 0 : index
    %c0_8 = arith.constant 0 : index
    %19 = vector.load %arg2[%c0_7, %c0_8] : memref<16x1xi32, #tpu.memory_space<vmem>>, vector<16x1xi32>
    %c0_9 = arith.constant 0 : index
    %c0_10 = arith.constant 0 : index
    %20 = vector.load %arg3[%c0_9, %c0_10] : memref<1x16xi32, #tpu.memory_space<vmem>>, vector<1x16xi32>
    %21 = vector.broadcast %19 : vector<16x1xi32> to vector<16x16xi32>
    %22 = vector.broadcast %20 : vector<1x16xi32> to vector<16x16xi32>
    %23 = arith.cmpi eq, %21, %22 : vector<16x16xi32>
    %24 = arith.andi %16, %18 : vector<16x16xi1>
    %cst_11 = arith.constant 1.000000e+00 : f32
    %cst_12 = arith.constant 0.000000e+00 : f32
    %25 = vector.broadcast %cst_11 : f32 to vector<16x16xf32>
    %26 = vector.broadcast %cst_12 : f32 to vector<16x16xf32>
    %27 = arith.select %24, %25, %26 : vector<16x16xi1>, vector<16x16xf32>
    %28 = arith.andi %23, %16 : vector<16x16xi1>
    %29 = arith.andi %28, %18 : vector<16x16xi1>
    %cst_13 = arith.constant 1.000000e+00 : f32
    %cst_14 = arith.constant 0.000000e+00 : f32
    %30 = vector.broadcast %cst_13 : f32 to vector<16x16xf32>
    %31 = vector.broadcast %cst_14 : f32 to vector<16x16xf32>
    %32 = arith.select %29, %30, %31 : vector<16x16xi1>, vector<16x16xf32>
    %c0_15 = arith.constant 0 : index
    %c0_16 = arith.constant 0 : index
    %33 = vector.load %arg7[%c0_15, %c0_16] : memref<16x1xf32, #tpu.memory_space<vmem>>, vector<16x1xf32>
    %cst_17 = arith.constant 0xFF800000 : f32
    %34 = vector.broadcast %cst_17 : f32 to vector<16x16xf32>
    %35 = arith.select %18, %7, %34 : vector<16x16xi1>, vector<16x16xf32>
    %cst_18 = arith.constant dense<0xFF800000> : vector<16xf32>
    %36 = vector.multi_reduction <maximumf>, %35, %cst_18 [1] : vector<16x16xf32> to vector<16xf32>
    %37 = vector.shape_cast %36 : vector<16xf32> to vector<16x1xf32>
    %38 = arith.maximumf %33, %37 : vector<16x1xf32>
    %39 = vector.broadcast %38 : vector<16x1xf32> to vector<16x16xf32>
    %40 = arith.subf %7, %39 : vector<16x16xf32>
    %41 = math.exp %40 : vector<16x16xf32>
    %42 = arith.mulf %41, %27 : vector<16x16xf32>
    %c0_19 = arith.constant 0 : index
    %c0_20 = arith.constant 0 : index
    %43 = vector.load %arg8[%c0_19, %c0_20] : memref<16x1xf32, #tpu.memory_space<vmem>>, vector<16x1xf32>
    %44 = arith.subf %33, %38 : vector<16x1xf32>
    %45 = math.exp %44 : vector<16x1xf32>
    %46 = arith.mulf %43, %45 : vector<16x1xf32>
    %cst_21 = arith.constant dense<0.000000e+00> : vector<16xf32>
    %47 = vector.multi_reduction <add>, %42, %cst_21 [1] : vector<16x16xf32> to vector<16xf32>
    %48 = vector.shape_cast %47 : vector<16xf32> to vector<16x1xf32>
    %49 = arith.addf %46, %48 : vector<16x1xf32>
    %c0_22 = arith.constant 0 : index
    %c0_23 = arith.constant 0 : index
    %50 = vector.load %arg8[%c0_22, %c0_23] : memref<16x1xf32, #tpu.memory_space<vmem>>, vector<16x1xf32>
    tpu.vector_store %arg8[%c0_22, %c0_23], %49 {strides = array<i32>} : memref<16x1xf32, #tpu.memory_space<vmem>>, vector<16x1xf32>,
    %c0_24 = arith.constant 0 : index
    %c0_25 = arith.constant 0 : index
    %51 = vector.load %arg7[%c0_24, %c0_25] : memref<16x1xf32, #tpu.memory_space<vmem>>, vector<16x1xf32>
    tpu.vector_store %arg7[%c0_24, %c0_25], %38 {strides = array<i32>} : memref<16x1xf32, #tpu.memory_space<vmem>>, vector<16x1xf32>,
    %c0_26 = arith.constant 0 : index
    %c0_27 = arith.constant 0 : index
    %52 = vector.load %arg9[%c0_26, %c0_27] : memref<16x1xf32, #tpu.memory_space<vmem>>, vector<16x1xf32>
    %53 = arith.mulf %32, %7 : vector<16x16xf32>
    %cst_28 = arith.constant dense<0.000000e+00> : vector<16xf32>
    %54 = vector.multi_reduction <add>, %53, %cst_28 [1] : vector<16x16xf32> to vector<16xf32>
    %55 = vector.shape_cast %54 : vector<16xf32> to vector<16x1xf32>
    %56 = arith.addf %52, %55 : vector<16x1xf32>
    %c0_29 = arith.constant 0 : index
    %c0_30 = arith.constant 0 : index
    %57 = vector.load %arg9[%c0_29, %c0_30] : memref<16x1xf32, #tpu.memory_space<vmem>>, vector<16x1xf32>
    tpu.vector_store %arg9[%c0_29, %c0_30], %56 {strides = array<i32>} : memref<16x1xf32, #tpu.memory_space<vmem>>, vector<16x1xf32>,
    %c0_31 = arith.constant 0 : index
    %c0_32 = arith.constant 0 : index
    %58 = vector.load %arg10[%c0_31, %c0_32] : memref<16x1xf32, #tpu.memory_space<vmem>>, vector<16x1xf32>
    %cst_33 = arith.constant dense<0.000000e+00> : vector<16xf32>
    %59 = vector.multi_reduction <add>, %32, %cst_33 [1] : vector<16x16xf32> to vector<16xf32>
    %60 = vector.shape_cast %59 : vector<16xf32> to vector<16x1xf32>
    %61 = arith.addf %58, %60 : vector<16x1xf32>
    %c0_34 = arith.constant 0 : index
    %c0_35 = arith.constant 0 : index
    %62 = vector.load %arg10[%c0_34, %c0_35] : memref<16x1xf32, #tpu.memory_space<vmem>>, vector<16x1xf32>
    tpu.vector_store %arg10[%c0_34, %c0_35], %61 {strides = array<i32>} : memref<16x1xf32, #tpu.memory_space<vmem>>, vector<16x1xf32>,
    %c0_i32_36 = arith.constant 0 : i32
    %63 = arith.cmpi eq, %arg1, %c0_i32_36 : i32
    %64 = arith.extui %63 : i1 to i32
    %c0_i32_37 = arith.constant 0 : i32
    %65 = arith.cmpi ne, %64, %c0_i32_37 : i32
    scf.if %65 {
      %c0_38 = arith.constant 0 : index
      %c0_39 = arith.constant 0 : index
      %66 = vector.load %arg7[%c0_38, %c0_39] : memref<16x1xf32, #tpu.memory_space<vmem>>, vector<16x1xf32>
      %c0_40 = arith.constant 0 : index
      %c0_41 = arith.constant 0 : index
      %67 = vector.load %arg8[%c0_40, %c0_41] : memref<16x1xf32, #tpu.memory_space<vmem>>, vector<16x1xf32>
      %68 = math.log %67 : vector<16x1xf32>
      %69 = arith.addf %66, %68 : vector<16x1xf32>
      %c0_42 = arith.constant 0 : index
      %c0_43 = arith.constant 0 : index
      %70 = vector.load %arg9[%c0_42, %c0_43] : memref<16x1xf32, #tpu.memory_space<vmem>>, vector<16x1xf32>
      %c0_44 = arith.constant 0 : index
      %c0_45 = arith.constant 0 : index
      %71 = vector.load %arg10[%c0_44, %c0_45] : memref<16x1xf32, #tpu.memory_space<vmem>>, vector<16x1xf32>
      %72 = arith.divf %70, %71 : vector<16x1xf32>
      %73 = arith.subf %72, %69 : vector<16x1xf32>
      %cst_46 = arith.constant -1.000000e+00 : f32
      %74 = vector.broadcast %cst_46 : f32 to vector<16x1xf32>
      %75 = arith.mulf %74, %73 : vector<16x1xf32>
      %c0_47 = arith.constant 0 : index
      %c0_48 = arith.constant 0 : index
      %76 = vector.load %arg6[%c0_47, %c0_48] : memref<16x1xf32, #tpu.memory_space<vmem>>, vector<16x1xf32>
      tpu.vector_store %arg6[%c0_47, %c0_48], %75 {strides = array<i32>} : memref<16x1xf32, #tpu.memory_space<vmem>>, vector<16x1xf32>,
    } else {
    }
    return
  }
  func.func @transform_0(%arg0: i32, %arg1: i32) -> (i32, i32) {
    %c0_i32 = arith.constant 0 : i32
    %c0_i32_0 = arith.constant 0 : i32
    return %arg0, %c0_i32 : i32, i32
  }
  func.func @transform_1(%arg0: i32, %arg1: i32) -> (i32, i32) {
    %c0_i32 = arith.constant 0 : i32
    %c0_i32_0 = arith.constant 0 : i32
    return %c0_i32, %arg1 : i32, i32
  }
  func.func @transform_2(%arg0: i32, %arg1: i32) -> (i32, i32) {
    %c0_i32 = arith.constant 0 : i32
    %c0_i32_0 = arith.constant 0 : i32
    return %arg0, %c0_i32 : i32, i32
  }
  func.func @transform_3(%arg0: i32, %arg1: i32) -> (i32, i32) {
    %c0_i32 = arith.constant 0 : i32
    %c0_i32_0 = arith.constant 0 : i32
    return %arg1, %c0_i32 : i32, i32
  }
  func.func @transform_4(%arg0: i32, %arg1: i32) -> (i32, i32) {
    %c0_i32 = arith.constant 0 : i32
    %c0_i32_0 = arith.constant 0 : i32
    return %arg0, %c0_i32 : i32, i32
  }
}

</mosaic_0001>

<llo_original>
// kernel: tpu_custom_call.1
$region0: #{tpu_custom_call.1}
  #allocation0 [shape = 'u32[]', space=smem, size = 0x4, offset = 0x4, fixed_abs, tag = 'smem constant byte address 0x4 - core index']
  #allocation1 [shape = 'u32[144,128]{1,0:T(1,128)}', space=vmem, size = 0x12000, scoped, tag = 'internal scratch']
  #allocation2 [shape = 'f32[16,1]{1,0:T(8,128)}', space=vmem, size = 0x2000, scoped, tag = 'scratch operand']
  #allocation3 [shape = 'f32[16,1]{1,0:T(8,128)}', space=vmem, size = 0x2000, scoped, tag = 'scratch operand']
  #allocation4 [shape = 'f32[16,1]{1,0:T(8,128)}', space=vmem, size = 0x2000, scoped, tag = 'scratch operand']
  #allocation5 [shape = 'f32[16,1]{1,0:T(8,128)}', space=vmem, size = 0x2000, scoped, tag = 'scratch operand']
  %s0 = inlined_call_operand.vmem [shape: s32[16,1], index: 0, kind: input, shape index: {}]
  %s1 = inlined_call_operand.vmem [shape: s32[1,16], index: 1, kind: input, shape index: {}]
  %s2 = inlined_call_operand.vmem [shape: f32[16,32], index: 2, kind: input, shape index: {}]
  %s3 = inlined_call_operand.hbm [shape: f32[16,32], index: 3, kind: input, shape index: {}]
  %s4 = inlined_call_operand.vmem [shape: f32[16,1], index: 4, kind: output, shape index: {}]
  %s5 = sld [smem:[#allocation0]]
  $region38: #{tpu_custom_call.1} parent=0
    _
  %s7 = ssub.s32 1, %s5
  %s8 = scalar_select 0, %s7, %s5
  $region1: #{tpu_custom_call.1} parent=0
    #allocation6 [shape = 'u8[8192]{0}', space=vmem, size = 0x2000, scoped, tag = 'input window, operand 3, single buffered']
    #allocation7 [shape = 's32[1]{0}', space=sflag, size = 0x4, scoped, tag = 'scoped memory for tpu_custom_call.1']
    %9 = vsyncpa [#allocation7], 0
    // Predicated region
    $region2: #{tpu_custom_call.1} parent=1 // pred_check
      _
    $region3: #{tpu_custom_call.1} parent=1 // pred_check_branch
      %11 = sbr.rel (0) target = $region5
    $region4: #{tpu_custom_call.1} parent=1 // pred_region
      _
    $region5: #{tpu_custom_call.1} parent=1 // pred_fallthru
      _
    // Predicated region
    $region6: #{tpu_custom_call.1} parent=1 // pred_check
      _
    $region7: #{tpu_custom_call.1} parent=1 // pred_check_branch
      %13 = sbr.rel (0) target = $region9
    $region8: #{tpu_custom_call.1} parent=1 // pred_region
      _
    $region9: #{tpu_custom_call.1} parent=1 // pred_fallthru
      _
    // Predicated region
    $region10: #{tpu_custom_call.1} parent=1 // pred_check
      _
    $region11: #{tpu_custom_call.1} parent=1 // pred_check_branch
      %15 = sbr.rel (0) target = $region13
    $region12: #{tpu_custom_call.1} parent=1 // pred_region
      _
    $region13: #{tpu_custom_call.1} parent=1 // pred_fallthru
      _
    // Predicated region
    $region14: #{tpu_custom_call.1} parent=1 // pred_check
      _
    $region15: #{tpu_custom_call.1} parent=1 // pred_check_branch
      %17 = sbr.rel (0) target = $region17
    $region16: #{tpu_custom_call.1} parent=1 // pred_region
      %s19 = ssub.s32 256, 256
      %20 = vsyncadd [#allocation7], %s19
      %s21 = sshll.u32 [#allocation6], 4
      %s22 = int_to_ptr.vmem [resolvable:$true] %s21
      %27 = dma.hbm_to_vmem [thread:$0]  %s3, 256, %s22, [#allocation7], 128, 128, 8
    $region17: #{tpu_custom_call.1} parent=1 // pred_fallthru
      _
    // Predicated region
    $region18: #{tpu_custom_call.1} parent=1 // pred_check
      _
    $region19: #{tpu_custom_call.1} parent=1 // pred_check_branch
      %29 = sbr.rel (0) target = $region21
    $region20: #{tpu_custom_call.1} parent=1 // pred_region
      %30 = dma.done [#allocation7], 256
    $region21: #{tpu_custom_call.1} parent=1 // pred_fallthru
      _
    %p31 = scmp.eq.s32.totalorder 0, 0
    // Predicated region
    $region22: #{tpu_custom_call.1} parent=1 // pred_check
      %p32 = pneg %p31
    $region23: #{tpu_custom_call.1} parent=1 // pred_check_branch
      %34 = sbr.rel (%p32) target = $region25
    $region24: #{tpu_custom_call.1} parent=1 // pred_region
      %vm35 = vcmask 7168
      %36 = vst.msk [vmem:[#allocation2] sm:$0xff] %vm35, -inf
      %37 = vst.msk [vmem:[#allocation2 + $0x8] sm:$0xff] %vm35, -inf
      %38 = vst.msk [vmem:[#allocation3] sm:$0xff] %vm35, 0.0
      %39 = vst.msk [vmem:[#allocation3 + $0x8] sm:$0xff] %vm35, 0.0
      %40 = vst.msk [vmem:[#allocation4] sm:$0xff] %vm35, 0.0
      %41 = vst.msk [vmem:[#allocation4 + $0x8] sm:$0xff] %vm35, 0.0
      %42 = vst.msk [vmem:[#allocation5] sm:$0xff] %vm35, 0.0
      %43 = vst.msk [vmem:[#allocation5 + $0x8] sm:$0xff] %vm35, 0.0
    $region25: #{tpu_custom_call.1} parent=1 // pred_fallthru
      _
    %v44 = vld [vmem:[%s2] sm:$0xff]
    %v45 = vld [vmem:[%s2 + $0x8] sm:$0xff]
    %v46 = vld [vmem:[#allocation6] sm:$0xff]
    %v47 = vld [vmem:[#allocation6 + $0x8] sm:$0xff]
    %vm48 = vcmask 261120
    %v50 = vsel %vm48, %v44, 0
    %v53 = vsel %vm48, %v45, 0
    %v56 = vsel %vm48, %v46, 0
    %v59 = vsel %vm48, %v47, 0
    %61 = vmatprep.subr.mxu0 0.0
    %62 = vmatpush1.xpose.msra.mxu0 %v56
    %63 = vmatprep.subr.mxu0 0.0
    %64 = vmatpush1.xpose.msra.mxu0 %v59
    %65 = vmatprep.subr.mxu0 0.0
    %66 = vmatpush1.xpose.msra.mxu0 0.0
    %67 = vmatprep.subr.mxu0 0.0
    %68 = vmatpush1.xpose.msra.mxu0 0.0
    %69 = vmatprep.subr.mxu0 0.0
    %70 = vmatpush1.xpose.msra.mxu0 0.0
    %71 = vmatprep.subr.mxu0 0.0
    %72 = vmatpush1.xpose.msra.mxu0 0.0
    %73 = vmatprep.subr.mxu0 0.0
    %74 = vmatpush1.xpose.msra.mxu0 0.0
    %75 = vmatprep.subr.mxu0 0.0
    %76 = vmatpush1.xpose.msra.mxu0 0.0
    %77 = vmatprep.subr.mxu0 0.0
    %78 = vmatpush1.xpose.msra.mxu0 0.0
    %79 = vmatprep.subr.mxu0 0.0
    %80 = vmatpush1.xpose.msra.mxu0 0.0
    %81 = vmatprep.subr.mxu0 0.0
    %82 = vmatpush1.xpose.msra.mxu0 0.0
    %83 = vmatprep.subr.mxu0 0.0
    %84 = vmatpush1.xpose.msra.mxu0 0.0
    %85 = vmatprep.subr.mxu0 0.0
    %86 = vmatpush1.xpose.msra.mxu0 0.0
    %87 = vmatprep.subr.mxu0 0.0
    %88 = vmatpush1.xpose.msra.mxu0 0.0
    %89 = vmatprep.subr.mxu0 0.0
    %90 = vmatpush1.xpose.msra.mxu0 0.0
    %91 = vmatprep.subr.mxu0 0.0
    %92 = vmatpush1.xpose.msra.mxu0 0.0
    %93 = vmatprep.subr.mxu0 0.0
    %94 = vmatpush1.xpose.msra.mxu0 0.0
    %95 = vmatprep.subr.mxu0 0.0
    %96 = vmatpush1.xpose.msra.mxu0 0.0
    %97 = vmatprep.subr.mxu0 0.0
    %98 = vmatpush1.xpose.msra.mxu0 0.0
    %99 = vmatprep.subr.mxu0 0.0
    %100 = vmatpush1.xpose.msra.mxu0 0.0
    %101 = vmatprep.subr.mxu0 0.0
    %102 = vmatpush1.xpose.msra.mxu0 0.0
    %103 = vmatprep.subr.mxu0 0.0
    %104 = vmatpush1.xpose.msra.mxu0 0.0
    %105 = vmatprep.subr.mxu0 0.0
    %106 = vmatpush1.xpose.msra.mxu0 0.0
    %107 = vmatprep.subr.mxu0 0.0
    %108 = vmatpush1.xpose.msra.mxu0 0.0
    %109 = vmatprep.subr.mxu0 0.0
    %110 = vmatpush1.xpose.msra.mxu0 0.0
    %111 = vmatprep.subr.mxu0 0.0
    %112 = vmatpush1.xpose.msra.mxu0 0.0
    %113 = vmatprep.subr.mxu0 0.0
    %114 = vmatpush1.xpose.msra.mxu0 0.0
    %115 = vmatprep.subr.mxu0 0.0
    %116 = vmatpush1.xpose.msra.mxu0 0.0
    %117 = vmatprep.subr.mxu0 0.0
    %118 = vmatpush1.xpose.msra.mxu0 0.0
    %119 = vmatprep.subr.mxu0 0.0
    %120 = vmatpush1.xpose.msra.mxu0 0.0
    %121 = vmatprep.subr.mxu0 0.0
    %122 = vmatpush1.xpose.msra.mxu0 0.0
    %123 = vmatprep.subr.mxu0 0.0
    %124 = vmatpush1.xpose.msra.mxu0 0.0
    %125 = vmatprep.mubr.f32.mxu0 0.0
    %126 = vmatmul.mubr.f32.gmra.mrb[0].mxu0 %v50
    %v127 = vpop.f32.mrb[0].mxu0
    %v128 = vadd.f32 0.0, %v127
    %v129 = vpop.f32.mrb[0].mxu0
    %130 = vmatprep.mubr.f32.mxu0 0.0
    %131 = vmatmul.mubr.f32.gmra.mrb[0].mxu0 %v53
    %v132 = vpop.f32.mrb[0].mxu0
    %v133 = vadd.f32 0.0, %v132
    %v134 = vpop.f32.mrb[0].mxu0
    %135 = vdwg.mxu0
    %v136 = vmul.f32 %v128, 14.285714
    %v137 = vmul.f32 %v133, 14.285714
    %s138 = smul.u32 0, 16
    %v139 = vlaneseq
    %v140 = vshrl.u32 %v139, 7
    %v141 = vadd.s32 %v140, 8
    %v142 = vstv %s138
    %v143 = vadd.s32 %v142, %v140
    %v144 = vadd.s32 %v142, %v141
    %s145 = smul.u32 0, 16
    %v146 = vlaneseq
    %v147 = vand.u32 %v146, 127
    %v148 = vstv %s145
    %v149 = vadd.s32 %v148, %v147
    %vm150 = vcmp.ne.s32.totalorder %v143, %v149
    %vm151 = vcmp.ne.s32.totalorder %v144, %v149
    %vm152 = vcmp.lt.s32.totalorder %v149, 16
    %v153 = vld [vmem:[%s0] sm:$0xff]
    %v154 = vld [vmem:[%s0 + $0x8] sm:$0xff]
    %v155 = vld [vmem:[%s1] sm:$0x1]
    %156 = vset.pattern.permute.xlu0 0
    %157 = vperm.xlu0 %156, %v153
    %v158 = vpop.permute.xlu0 %157
    %159 = vset.pattern.permute.xlu0 0
    %160 = vperm.xlu0 %159, %v154
    %v161 = vpop.permute.xlu0 %160
    %v162 = vlaneseq
    %v163 = vshrl.u32 %v162, 7
    %v164 = vsub.s32 0, %v163
    %v165 = vrot.slane %v155, %v164
    %vm166 = vcmp.eq.s32.totalorder %v158, %v165
    %vm167 = vcmp.eq.s32.totalorder %v161, %v165
    %vm168 = vmand %vm150, %vm152
    %vm169 = vmand %vm151, %vm152
    %v170 = vsel %vm168, 1.0, 0.0
    %v171 = vsel %vm169, 1.0, 0.0
    %vm172 = vmand %vm166, %vm150
    %vm173 = vmand %vm167, %vm151
    %vm174 = vmand %vm172, %vm152
    %vm175 = vmand %vm173, %vm152
    %v176 = vsel %vm174, 1.0, 0.0
    %v177 = vsel %vm175, 1.0, 0.0
    %v178 = vld [vmem:[#allocation2] sm:$0xff]
    %v179 = vld [vmem:[#allocation2 + $0x8] sm:$0xff]
    %v180 = vsel %vm152, %v136, -inf
    %v181 = vsel %vm152, %v137, -inf
    %vm182 = vcmask 130048
    %v183 = vsel %vm182, %v180, -inf
    %184 = vmax.xlane.f32.xlu0 %v183
    %v185 = vpop.xlane.xlu0 %184
    %v186 = vsel %vm182, %v181, -inf
    %187 = vmax.xlane.f32.xlu0 %v186
    %v188 = vpop.xlane.xlu0 %187
    %v189 = vmax.f32 %v178, %v185
    %v190 = vmax.f32 %v179, %v188
    %192 = vset.pattern.permute.xlu0 0
    %193 = vperm.xlu0 %192, %v189
    %v194 = vpop.permute.xlu0 %193
    %197 = vset.pattern.permute.xlu0 0
    %198 = vperm.xlu0 %197, %v190
    %v199 = vpop.permute.xlu0 %198
    %v201 = vsub.f32 %v136, %v194
    %v202 = vsub.f32 %v137, %v199
    %v203 = vmul.f32 %v201, 1.442695
    %v204 = vpow.pop %v203
    %v205 = vmul.f32 %v202, 1.442695
    %v206 = vpow.pop %v205
    %v207 = vmul.f32 %v204, %v170
    %v208 = vmul.f32 %v206, %v171
    %v209 = vld [vmem:[#allocation3] sm:$0xff]
    %v210 = vld [vmem:[#allocation3 + $0x8] sm:$0xff]
    %v211 = vsub.f32 %v178, %v189
    %v212 = vsub.f32 %v179, %v190
    %v213 = vmul.f32 %v211, 1.442695
    %v214 = vpow.pop %v213
    %v215 = vmul.f32 %v212, 1.442695
    %v216 = vpow.pop %v215
    %v217 = vmul.f32 %v209, %v214
    %v218 = vmul.f32 %v210, %v216
    %v219 = vsel %vm182, %v207, 0.0
    %220 = vadd.xlane.f32.xlu0 %v219
    %v221 = vpop.xlane.xlu0 %220
    %v222 = vsel %vm182, %v208, 0.0
    %223 = vadd.xlane.f32.xlu0 %v222
    %v224 = vpop.xlane.xlu0 %223
    %v225 = vadd.f32 %v217, %v221
    %v226 = vadd.f32 %v218, %v224
    %vm227 = vcmask 7168
    %228 = vst.msk [vmem:[#allocation3] sm:$0xff] %vm227, %v225
    %229 = vst.msk [vmem:[#allocation3 + $0x8] sm:$0xff] %vm227, %v226
    %230 = vst.msk [vmem:[#allocation2] sm:$0xff] %vm227, %v189
    %231 = vst.msk [vmem:[#allocation2 + $0x8] sm:$0xff] %vm227, %v190
    %v232 = vld [vmem:[#allocation4] sm:$0xff]
    %v233 = vld [vmem:[#allocation4 + $0x8] sm:$0xff]
    %v234 = vmul.f32 %v176, %v136
    %v235 = vmul.f32 %v177, %v137
    %v236 = vsel %vm182, %v234, 0.0
    %237 = vadd.xlane.f32.xlu0 %v236
    %v238 = vpop.xlane.xlu0 %237
    %v239 = vsel %vm182, %v235, 0.0
    %240 = vadd.xlane.f32.xlu0 %v239
    %v241 = vpop.xlane.xlu0 %240
    %v242 = vadd.f32 %v232, %v238
    %v243 = vadd.f32 %v233, %v241
    %244 = vst.msk [vmem:[#allocation4] sm:$0xff] %vm227, %v242
    %245 = vst.msk [vmem:[#allocation4 + $0x8] sm:$0xff] %vm227, %v243
    %v246 = vld [vmem:[#allocation5] sm:$0xff]
    %v247 = vld [vmem:[#allocation5 + $0x8] sm:$0xff]
    %v248 = vsel %vm182, %v176, 0.0
    %249 = vadd.xlane.f32.xlu0 %v248
    %v250 = vpop.xlane.xlu0 %249
    %v251 = vsel %vm182, %v177, 0.0
    %252 = vadd.xlane.f32.xlu0 %v251
    %v253 = vpop.xlane.xlu0 %252
    %v254 = vadd.f32 %v246, %v250
    %v255 = vadd.f32 %v247, %v253
    %256 = vst.msk [vmem:[#allocation5] sm:$0xff] %vm227, %v254
    %257 = vst.msk [vmem:[#allocation5 + $0x8] sm:$0xff] %vm227, %v255
    // Predicated region
    $region26: #{tpu_custom_call.1} parent=1 // pred_check
      %p258 = pneg %p31
    $region27: #{tpu_custom_call.1} parent=1 // pred_check_branch
      %260 = sbr.rel (%p258) target = $region29
    $region28: #{tpu_custom_call.1} parent=1 // pred_region
      %v261 = vld [vmem:[#allocation2] sm:$0xff]
      %v262 = vld [vmem:[#allocation2 + $0x8] sm:$0xff]
      %v263 = vld [vmem:[#allocation3] sm:$0xff]
      %v264 = vld [vmem:[#allocation3 + $0x8] sm:$0xff]
      %v265 = vlog2.pop %v263
      %v266 = vmul.f32 %v265, 0.6931472
      %v267 = vlog2.pop %v264
      %v268 = vmul.f32 %v267, 0.6931472
      %v269 = vadd.f32 %v261, %v266
      %v270 = vadd.f32 %v262, %v268
      %v271 = vld [vmem:[#allocation4] sm:$0xff]
      %v272 = vld [vmem:[#allocation4 + $0x8] sm:$0xff]
      %v273 = vld [vmem:[#allocation5] sm:$0xff]
      %v274 = vld [vmem:[#allocation5 + $0x8] sm:$0xff]
      %v275 = vrcp.pop %v273
      %v276 = vmul.f32 %v271, %v275
      %v277 = vrcp.pop %v274
      %v278 = vmul.f32 %v272, %v277
      %v279 = vsub.f32 %v276, %v269
      %v280 = vsub.f32 %v278, %v270
      %v281 = vmul.f32 %v279, -1.0
      %v282 = vmul.f32 %v280, -1.0
      %283 = vst.msk [vmem:[%s4] sm:$0xff] %vm227, %v281
      %284 = vst.msk [vmem:[%s4 + $0x8] sm:$0xff] %vm227, %v282
    $region29: #{tpu_custom_call.1} parent=1 // pred_fallthru
      _
    // Predicated region
    $region30: #{tpu_custom_call.1} parent=1 // pred_check
      _
    $region31: #{tpu_custom_call.1} parent=1 // pred_check_branch
      %286 = sbr.rel (0) target = $region33
    $region32: #{tpu_custom_call.1} parent=1 // pred_region
      _
    $region33: #{tpu_custom_call.1} parent=1 // pred_fallthru
      _
    // Predicated region
    $region34: #{tpu_custom_call.1} parent=1 // pred_check
      _
    $region35: #{tpu_custom_call.1} parent=1 // pred_check_branch
      %288 = sbr.rel (0) target = $region37
    $region36: #{tpu_custom_call.1} parent=1 // pred_region
      _
    $region37: #{tpu_custom_call.1} parent=1 // pred_fallthru
      _
    %289 = vsyncpa [#allocation7], 1

</llo_original>
